<compile_context>
chip_gen: v5e
topology: v5e:2x2
jax: 0.10.0
libtpu: 0.0.40
codegen_flags: <defaults>
</compile_context>

<pallas_src>
import jax
import jax.numpy as jnp
from jax.experimental import pallas as pl
from jax.experimental.pallas import tpu as pltpu


def _cnn_resblock_kernel(alpha_ref,   # SMEM (1,)           PReLU slope
                         x_ref,       # VMEM (bb, Dp, TL)    input slab (NCL, length on lanes)
                         halo_ref,    # VMEM (bb, 1, Dp, 2)  x at tile_start-1 / tile_end
                         w1_ref,      # VMEM (Hp, Dp)        conv1 (k=1) weight
                         b1_ref,      # VMEM (Hp, 1)
                         w2c_ref,     # VMEM (3Dp, Hp)       conv2 taps stacked on output rows
                         b2_ref,      # VMEM (Dp, 1)
                         o_ref):      # VMEM (bb, Dp, TL)
    BB, Dp, TL = o_ref.shape

    alpha = alpha_ref[0]
    w1 = w1_ref[...]
    w2c = w2c_ref[...]
    b1 = b1_ref[...]
    b2 = b2_ref[...]

    # Loop-invariant pieces hoisted out of the batch loop.
    w2_t0 = w2c[0:Dp]                 # tap for input offset -1
    w2_t2 = w2c[2 * Dp:3 * Dp]        # tap for input offset +1
    lane = jax.lax.broadcasted_iota(jnp.int32, (1, TL), 1)

    for b in range(BB):               # bb is small & static: amortizes grid overhead
        x = x_ref[b]                  # (Dp, TL)
        xh = halo_ref[b, 0]           # (Dp, 2)

        # --- conv1 (kernel_size=1): channel-contraction matmul + 2 halo cols --
        h = jnp.dot(w1, x.astype(w1.dtype), preferred_element_type=jnp.float32) + b1
        hh = jnp.dot(w1, xh.astype(w1.dtype), preferred_element_type=jnp.float32) + b1

        # --- PReLU (single shared alpha, PyTorch default) ----------------------
        h = jnp.where(h > 0, h, alpha * h)
        hh = jnp.where(hh > 0, hh, alpha * hh)

        # --- conv2 (kernel_size=3, padding=1, replicate) -----------------------
        # Taps only contract channels, so shift(h) @ W == shift(h @ W): one fused
        # (3Dp,Hp)@(Hp,TL) dot, then shift the cheap Dp-wide tap results.  Only
        # the two halo output columns that are used are computed.
        hc = h.astype(w2c.dtype)
        hhc = hh.astype(w2c.dtype)
        y = jnp.dot(w2c, hc, preferred_element_type=jnp.float32)            # (3Dp, TL)
        yl = jnp.dot(w2_t0, hhc[:, 0:1], preferred_element_type=jnp.float32)  # (Dp, 1)
        yr = jnp.dot(w2_t2, hhc[:, 1:2], preferred_element_type=jnp.float32)  # (Dp, 1)

        y0 = y[0:Dp]
        y1 = y[Dp:2 * Dp]
        y2 = y[2 * Dp:3 * Dp]

        # out[l] needs y0[l-1]: roll toward higher l; left edge from the halo.
        y0s = pltpu.roll(y0, shift=1, axis=1)
        y0s = jnp.where(lane == 0, yl, y0s)
        # out[l] needs y2[l+1]: roll by TL-1 (== -1 mod TL, shift must be >= 0);
        # right edge from the halo.
        y2s = pltpu.roll(y2, shift=TL - 1, axis=1)
        y2s = jnp.where(lane == TL - 1, yr, y2s)

        out = y0s + y1 + y2s + b2 + x          # bias + residual, all f32
        o_ref[b] = out.astype(o_ref.dtype)


def _round_up(x, m):
    return (x + m - 1) // m * m


def _choose_l_tile(lp):
    # lp is already a multiple of 128; take the largest tile (<= 2048) dividing
    # it so every step streams a reasonably large, lane-dense slab.
    for cand in (2048, 1024, 512, 256, 128):
        if cand <= lp and lp % cand == 0:
            return cand
    return lp


def _vmem_limit_bytes(per_step_bytes):
    # Generation-aware cap: leave headroom below the physical per-core VMEM
    # (64 MiB on v7x, 128 MiB on v5e/v6e).  Fall back conservatively if the
    # query is unavailable (e.g. interpret mode / CPU emulation).
    try:
        cap = int(pltpu.get_tpu_info().vmem_capacity_bytes)
    except Exception:
        cap = 64 * 1024 * 1024
    return int(min(max(2 * per_step_bytes, 32 * 1024 * 1024), (cap * 3) // 4))


def cnn_resblock(x_ncl, w1, b1, alpha, w2, b2, *, tl=None, bb=None,
                 mxu_dtype=jnp.bfloat16):
    """x_ncl: (B, dim, L) float (PyTorch NCL layout).  Returns (B, dim, L).

    mxu_dtype controls only the matmul *operand* dtype (bias / PReLU / residual
    and accumulation stay f32).  bf16 is the fast path on v5e/v6e/v7x; pass
    jnp.float32 for exact-f32 MXU semantics.
    """
    B, D, L = x_ncl.shape
    H = w1.shape[0]

    # --- pad channels/hidden to sublane multiples, length to lane multiples ---
    Dp = _round_up(D, 8)
    Hp = _round_up(H, 8)
    # TODO(synk): for production shapes pad D/H further to 128 (v5e) / 256
    # (v6e, v7x) multiples so the MXU contraction & output dims are fully used.

    if tl is None:
        Lp = _round_up(L, 128)
        tl = _choose_l_tile(Lp)
    else:
        if tl % 128 != 0:
            raise ValueError(f"tl={tl} must be a multiple of 128")
        Lp = _round_up(L, tl)
    n_t = Lp // tl

    if bb is None:
        bb = B if B <= 4 else next((c for c in (8, 4, 2) if B % c == 0), 1)
    if B % bb != 0:
        raise ValueError(f"bb={bb} must divide B={B}")

    xp = x_ncl
    if Lp > L:      # replicate-pad the length (matches padding_mode='replicate')
        xp = jnp.pad(xp, ((0, 0), (0, 0), (0, Lp - L)), mode="edge")
    if Dp > D:      # zero-pad channels (cropped after the call)
        xp = jnp.pad(xp, ((0, 0), (0, Dp - D), (0, 0)))

    # Halo columns: for tile i the x columns at (i*tl - 1) and ((i+1)*tl), with
    # replicate padding at the true ends.  Two columns per tile keep every grid
    # step independent (no carried state -> both grid axes parallel).
    t = jnp.arange(n_t)
    left = jnp.maximum(t * tl - 1, 0)
    right = jnp.minimum((t + 1) * tl, Lp - 1)
    halo = jnp.stack([xp[:, :, left], xp[:, :, right]], axis=-1)   # (B, Dp, nT, 2)
    halo = jnp.transpose(halo, (0, 2, 1, 3))                       # (B, nT, Dp, 2)

    wd = jnp.dtype(mxu_dtype) if mxu_dtype is not None else jnp.dtype(x_ncl.dtype)
    w1p = jnp.zeros((Hp, Dp), jnp.float32).at[:H, :D].set(w1).astype(wd)
    w2p = jnp.zeros((Dp, Hp, 3), jnp.float32).at[:D, :H, :].set(w2)
    # conv2 weight (D, H, 3) -> taps stacked on output rows: (3Dp, Hp)
    w2c = jnp.transpose(w2p, (2, 0, 1)).reshape(3 * Dp, Hp).astype(wd)
    b1p = jnp.zeros((Hp, 1), jnp.float32).at[:H, 0].set(b1)
    b2p = jnp.zeros((Dp, 1), jnp.float32).at[:D, 0].set(b2)
    alpha_arr = jnp.asarray(alpha, jnp.float32).reshape(1)

    def _resident(shape):
        # Grid-invariant operand: index_map is constant, so double-buffering it
        # only doubles VMEM for zero pipelining benefit -> single-buffer it.
        imap = lambda b, i: (0,) * len(shape)
        try:
            return pl.BlockSpec(shape, imap, pipeline_mode=pl.Buffered(1))
        except Exception:   # pipeline_mode unavailable: fall back to default
            return pl.BlockSpec(shape, imap)

    # Advisory cost estimate + VMEM sizing for the chosen slab.
    itm = 4
    flops = 8 * B * Lp * Dp * Hp               # conv1 (2*D*H) + conv2 (2*H*3D) / position
    bytes_accessed = int(2 * B * Dp * Lp * itm + B * n_t * Dp * 2 * itm
                         + 4 * Dp * Hp * wd.itemsize + (Hp + Dp) * itm)
    per_step = (2 * 2 * bb * Dp * tl * itm     # x + out slabs, double-buffered
                + 2 * 2 * bb * Dp * itm        # halo columns, double-buffered
                + 4 * Dp * Hp * wd.itemsize    # weights, single-buffered
                + (Hp + Dp) * itm              # biases
                + Hp * (tl + 2) * itm          # hidden activation (+ halo cols)
                + 7 * Dp * tl * itm)           # fused tap results + shifted temps
    vmem_limit = _vmem_limit_bytes(per_step)

    out_p = pl.pallas_call(
        _cnn_resblock_kernel,
        out_shape=jax.ShapeDtypeStruct((B, Dp, Lp), x_ncl.dtype),
        grid=(B // bb, n_t),
        in_specs=[
            pl.BlockSpec(memory_space=pltpu.SMEM),                       # alpha
            pl.BlockSpec((bb, Dp, tl), lambda b, i: (b, 0, i)),          # x slab
            pl.BlockSpec((bb, 1, Dp, 2), lambda b, i: (b, i, 0, 0)),     # halo cols
            _resident((Hp, Dp)),                                         # conv1 weight
            _resident((Hp, 1)),                                          # conv1 bias
            _resident((3 * Dp, Hp)),                                     # fused conv2 weight
            _resident((Dp, 1)),                                          # conv2 bias
        ],
        out_specs=pl.BlockSpec((bb, Dp, tl), lambda b, i: (b, 0, i)),
        compiler_params=pltpu.CompilerParams(
            dimension_semantics=("parallel", "parallel"),
            vmem_limit_bytes=vmem_limit),
        cost_estimate=pl.CostEstimate(flops=flops, transcendentals=0,
                                      bytes_accessed=bytes_accessed),
    )(alpha_arr, xp, halo, w1p, b1p, w2c, b2p)

    return out_p[:, :D, :L]


def _ref_forward(x_ncl, w1, b1, alpha, w2, b2):
    """Pure-jnp reference mirroring the PyTorch forward (f32)."""
    h = jnp.einsum('bcl,hc->bhl', x_ncl, w1) + b1[None, :, None]
    h = jnp.where(h > 0, h, alpha * h)
    hp = jnp.concatenate([h[:, :, :1], h, h[:, :, -1:]], axis=-1)   # replicate pad
    L = x_ncl.shape[-1]
    out = (jnp.einsum('bhl,dh->bdl', hp[:, :, 0:L],     w2[:, :, 0])
           + jnp.einsum('bhl,dh->bdl', hp[:, :, 1:L + 1], w2[:, :, 1])
           + jnp.einsum('bhl,dh->bdl', hp[:, :, 2:L + 2], w2[:, :, 2])
           + b2[None, :, None])
    return out + x_ncl


if __name__ == "__main__":
    B, D, H = 2, 4, 32

    key = jax.random.PRNGKey(0)
    kx1, kx2, kx3, k1, k2, k3, k4 = jax.random.split(key, 7)

    w1 = jax.random.normal(k1, (H, D), jnp.float32) * 0.1      # Conv1d(dim->hidden, k=1) weight (k squeezed)
    b1 = jax.random.normal(k2, (H,), jnp.float32) * 0.1
    w2 = jax.random.normal(k3, (D, H, 3), jnp.float32) * 0.1   # Conv1d(hidden->dim, k=3) weight
    b2 = jax.random.normal(k4, (D,), jnp.float32) * 0.1
    alpha = jnp.float32(0.25)                                  # PReLU default init

    # 1) single length tile, exact-f32 MXU operands
    x1 = jax.random.normal(kx1, (B, D, 128), jnp.float32)      # NCL, like torch
    out1 = jax.block_until_ready(
        cnn_resblock(x1, w1, b1, alpha, w2, b2, mxu_dtype=jnp.float32))
    ref1 = _ref_forward(x1, w1, b1, alpha, w2, b2)
    assert out1.shape == x1.shape
    assert jnp.allclose(out1, ref1, atol=1e-4, rtol=1e-4), "mismatch (single tile)"

    # 2) multi-tile: exercises the L-tiling + halo + roll path
    x2 = jax.random.normal(kx2, (B, D, 256), jnp.float32)
    ref2 = _ref_forward(x2, w1, b1, alpha, w2, b2)
    out2 = jax.block_until_ready(
        cnn_resblock(x2, w1, b1, alpha, w2, b2, tl=128, mxu_dtype=jnp.float32))
    assert jnp.allclose(out2, ref2, atol=1e-4, rtol=1e-4), "mismatch (tiled L + halo)"

    # 3) ragged L (pads 200 -> 256 with replicate, then crops), exact f32
    x3 = jax.random.normal(kx3, (B, D, 200), jnp.float32)
    ref3 = _ref_forward(x3, w1, b1, alpha, w2, b2)
    out3 = jax.block_until_ready(
        cnn_resblock(x3, w1, b1, alpha, w2, b2, mxu_dtype=jnp.float32))
    assert out3.shape == x3.shape
    assert jnp.allclose(out3, ref3, atol=1e-4, rtol=1e-4), "mismatch (ragged L)"

    # 4) default bf16 MXU operands (v5e/v6e/v7x fast path; numerics-visible)
    out4 = jax.block_until_ready(cnn_resblock(x2, w1, b1, alpha, w2, b2, tl=128))
    assert jnp.allclose(out4, ref2, atol=5e-2, rtol=5e-2), "mismatch (bf16 MXU path)"

    print("KERNEL_OK")
</pallas_src>

<mosaic_0001>
module attributes {stable_mosaic.version = 11 : i64} {
  func.func @_cnn_resblock_kernel(%arg0: i32, %arg1: i32, %arg2: memref<1xf32, #tpu.memory_space<smem>>, %arg3: memref<2x8x128xf32, #tpu.memory_space<vmem>>, %arg4: memref<2x1x8x2xf32, #tpu.memory_space<vmem>>, %arg5: memref<32x8xf32, #tpu.memory_space<vmem>>, %arg6: memref<32x1xf32, #tpu.memory_space<vmem>>, %arg7: memref<24x32xf32, #tpu.memory_space<vmem>>, %arg8: memref<8x1xf32, #tpu.memory_space<vmem>>, %arg9: memref<2x8x128xf32, #tpu.memory_space<vmem>>) attributes {dimension_semantics = [#tpu.dimension_semantics<parallel>, #tpu.dimension_semantics<parallel>], iteration_bounds = array<i64: 1, 1>, scalar_prefetch = 0 : i64, scratch_operands = 0 : i64, tpu.core_type = #tpu.core_type<tc>, window_params = [{transform_indices = @transform_0, window_bounds = array<i64: 1>}, {transform_indices = @transform_1, window_bounds = array<i64: 2, 8, 128>}, {transform_indices = @transform_2, window_bounds = array<i64: 2, 1, 8, 2>}, {pipeline_mode = #tpu.pipeline_mode<synchronous>, transform_indices = @transform_3, window_bounds = array<i64: 32, 8>}, {pipeline_mode = #tpu.pipeline_mode<synchronous>, transform_indices = @transform_4, window_bounds = array<i64: 32, 1>}, {pipeline_mode = #tpu.pipeline_mode<synchronous>, transform_indices = @transform_5, window_bounds = array<i64: 24, 32>}, {pipeline_mode = #tpu.pipeline_mode<synchronous>, transform_indices = @transform_6, window_bounds = array<i64: 8, 1>}, {transform_indices = @transform_7, window_bounds = array<i64: 2, 8, 128>}]} {
    %c0 = arith.constant 0 : index
    %0 = memref.load %arg2[%c0] : memref<1xf32, #tpu.memory_space<smem>>
    %c0_0 = arith.constant 0 : index
    %c0_1 = arith.constant 0 : index
    %1 = vector.load %arg5[%c0_0, %c0_1] : memref<32x8xf32, #tpu.memory_space<vmem>>, vector<32x8xf32>
    %c0_2 = arith.constant 0 : index
    %c0_3 = arith.constant 0 : index
    %2 = vector.load %arg7[%c0_2, %c0_3] : memref<24x32xf32, #tpu.memory_space<vmem>>, vector<24x32xf32>
    %c0_4 = arith.constant 0 : index
    %c0_5 = arith.constant 0 : index
    %3 = vector.load %arg6[%c0_4, %c0_5] : memref<32x1xf32, #tpu.memory_space<vmem>>, vector<32x1xf32>
    %c0_6 = arith.constant 0 : index
    %c0_7 = arith.constant 0 : index
    %4 = vector.load %arg8[%c0_6, %c0_7] : memref<8x1xf32, #tpu.memory_space<vmem>>, vector<8x1xf32>
    %5 = vector.extract_strided_slice %2 {offsets = [0, 0], sizes = [8, 32], strides = [1, 1]} : vector<24x32xf32> to vector<8x32xf32>
    %6 = vector.extract_strided_slice %2 {offsets = [16, 0], sizes = [8, 32], strides = [1, 1]} : vector<24x32xf32> to vector<8x32xf32>
    %7 = tpu.iota {dimensions = array<i32: 1>} : vector<1x128xi32>
    %c0_8 = arith.constant 0 : index
    %c0_9 = arith.constant 0 : index
    %c0_10 = arith.constant 0 : index
    %8 = vector.load %arg3[%c0_8, %c0_9, %c0_10] : memref<2x8x128xf32, #tpu.memory_space<vmem>>, vector<1x8x128xf32>
    %9 = vector.shape_cast %8 : vector<1x8x128xf32> to vector<8x128xf32>
    %c0_11 = arith.constant 0 : index
    %c0_12 = arith.constant 0 : index
    %c0_13 = arith.constant 0 : index
    %c0_14 = arith.constant 0 : index
    %10 = vector.load %arg4[%c0_11, %c0_12, %c0_13, %c0_14] : memref<2x1x8x2xf32, #tpu.memory_space<vmem>>, vector<1x1x8x2xf32>
    %11 = vector.shape_cast %10 : vector<1x1x8x2xf32> to vector<8x2xf32>
    %cst = arith.constant dense<0.000000e+00> : vector<32x128xf32>
    %12 = tpu.matmul %1, %9, %cst {dimension_numbers = #tpu.dot_dimension_numbers<[1], [0], [0], [1], [0, 0, 1, 1], [], []>} : vector<32x8xf32>, vector<8x128xf32>, vector<32x128xf32> -> vector<32x128xf32>
    %13 = vector.broadcast %3 : vector<32x1xf32> to vector<32x128xf32>
    %14 = arith.addf %12, %13 : vector<32x128xf32>
    %cst_15 = arith.constant dense<0.000000e+00> : vector<32x2xf32>
    %15 = tpu.matmul %1, %11, %cst_15 {dimension_numbers = #tpu.dot_dimension_numbers<[1], [0], [0], [1], [0, 0, 1, 1], [], []>} : vector<32x8xf32>, vector<8x2xf32>, vector<32x2xf32> -> vector<32x2xf32>
    %16 = vector.broadcast %3 : vector<32x1xf32> to vector<32x2xf32>
    %17 = arith.addf %15, %16 : vector<32x2xf32>
    %cst_16 = arith.constant 0.000000e+00 : f32
    %18 = vector.broadcast %cst_16 : f32 to vector<32x128xf32>
    %19 = arith.cmpf ogt, %14, %18 : vector<32x128xf32>
    %20 = vector.broadcast %0 : f32 to vector<32x128xf32>
    %21 = arith.mulf %20, %14 : vector<32x128xf32>
    %22 = arith.select %19, %14, %21 : vector<32x128xi1>, vector<32x128xf32>
    %cst_17 = arith.constant 0.000000e+00 : f32
    %23 = vector.broadcast %cst_17 : f32 to vector<32x2xf32>
    %24 = arith.cmpf ogt, %17, %23 : vector<32x2xf32>
    %25 = vector.broadcast %0 : f32 to vector<32x2xf32>
    %26 = arith.mulf %25, %17 : vector<32x2xf32>
    %27 = arith.select %24, %17, %26 : vector<32x2xi1>, vector<32x2xf32>
    %cst_18 = arith.constant dense<0.000000e+00> : vector<24x128xf32>
    %28 = tpu.matmul %2, %22, %cst_18 {dimension_numbers = #tpu.dot_dimension_numbers<[1], [0], [0], [1], [0, 0, 1, 1], [], []>} : vector<24x32xf32>, vector<32x128xf32>, vector<24x128xf32> -> vector<24x128xf32>
    %29 = vector.extract_strided_slice %27 {offsets = [0, 0], sizes = [32, 1], strides = [1, 1]} : vector<32x2xf32> to vector<32x1xf32>
    %cst_19 = arith.constant dense<0.000000e+00> : vector<8x1xf32>
    %30 = tpu.matmul %5, %29, %cst_19 {dimension_numbers = #tpu.dot_dimension_numbers<[1], [0], [0], [1], [0, 0, 1, 1], [], []>} : vector<8x32xf32>, vector<32x1xf32>, vector<8x1xf32> -> vector<8x1xf32>
    %31 = vector.extract_strided_slice %27 {offsets = [0, 1], sizes = [32, 1], strides = [1, 1]} : vector<32x2xf32> to vector<32x1xf32>
    %cst_20 = arith.constant dense<0.000000e+00> : vector<8x1xf32>
    %32 = tpu.matmul %6, %31, %cst_20 {dimension_numbers = #tpu.dot_dimension_numbers<[1], [0], [0], [1], [0, 0, 1, 1], [], []>} : vector<8x32xf32>, vector<32x1xf32>, vector<8x1xf32> -> vector<8x1xf32>
    %33 = vector.extract_strided_slice %28 {offsets = [0, 0], sizes = [8, 128], strides = [1, 1]} : vector<24x128xf32> to vector<8x128xf32>
    %34 = vector.extract_strided_slice %28 {offsets = [8, 0], sizes = [8, 128], strides = [1, 1]} : vector<24x128xf32> to vector<8x128xf32>
    %35 = vector.extract_strided_slice %28 {offsets = [16, 0], sizes = [8, 128], strides = [1, 1]} : vector<24x128xf32> to vector<8x128xf32>
    %c1_i32 = arith.constant 1 : i32
    %36 = tpu.dynamic_rotate %33 by %c1_i32 dim 1 : vector<8x128xf32>, i32 -> vector<8x128xf32>
    %c0_i32 = arith.constant 0 : i32
    %37 = vector.broadcast %c0_i32 : i32 to vector<1x128xi32>
    %38 = arith.cmpi eq, %7, %37 : vector<1x128xi32>
    %39 = vector.shape_cast %38 : vector<1x128xi1> to vector<1x128xi1>
    %40 = vector.broadcast %39 : vector<1x128xi1> to vector<8x128xi1>
    %41 = vector.shape_cast %30 : vector<8x1xf32> to vector<8x1xf32>
    %42 = vector.broadcast %41 : vector<8x1xf32> to vector<8x128xf32>
    %43 = arith.select %40, %42, %36 : vector<8x128xi1>, vector<8x128xf32>
    %c127_i32 = arith.constant 127 : i32
    %44 = tpu.dynamic_rotate %35 by %c127_i32 dim 1 : vector<8x128xf32>, i32 -> vector<8x128xf32>
    %c127_i32_21 = arith.constant 127 : i32
    %45 = vector.broadcast %c127_i32_21 : i32 to vector<1x128xi32>
    %46 = arith.cmpi eq, %7, %45 : vector<1x128xi32>
    %47 = vector.shape_cast %46 : vector<1x128xi1> to vector<1x128xi1>
    %48 = vector.broadcast %47 : vector<1x128xi1> to vector<8x128xi1>
    %49 = vector.shape_cast %32 : vector<8x1xf32> to vector<8x1xf32>
    %50 = vector.broadcast %49 : vector<8x1xf32> to vector<8x128xf32>
    %51 = arith.select %48, %50, %44 : vector<8x128xi1>, vector<8x128xf32>
    %52 = arith.addf %43, %34 : vector<8x128xf32>
    %53 = arith.addf %52, %51 : vector<8x128xf32>
    %54 = vector.broadcast %4 : vector<8x1xf32> to vector<8x128xf32>
    %55 = arith.addf %53, %54 : vector<8x128xf32>
    %56 = arith.addf %55, %9 : vector<8x128xf32>
    %c0_22 = arith.constant 0 : index
    %c0_23 = arith.constant 0 : index
    %c0_24 = arith.constant 0 : index
    %57 = vector.load %arg9[%c0_22, %c0_23, %c0_24] : memref<2x8x128xf32, #tpu.memory_space<vmem>>, vector<1x8x128xf32>
    %58 = vector.shape_cast %57 : vector<1x8x128xf32> to vector<8x128xf32>
    %59 = vector.shape_cast %56 : vector<8x128xf32> to vector<1x8x128xf32>
    tpu.vector_store %arg9[%c0_22, %c0_23, %c0_24], %59 {strides = array<i32>} : memref<2x8x128xf32, #tpu.memory_space<vmem>>, vector<1x8x128xf32>,
    %c1 = arith.constant 1 : index
    %c0_25 = arith.constant 0 : index
    %c0_26 = arith.constant 0 : index
    %60 = vector.load %arg3[%c1, %c0_25, %c0_26] : memref<2x8x128xf32, #tpu.memory_space<vmem>>, vector<1x8x128xf32>
    %61 = vector.shape_cast %60 : vector<1x8x128xf32> to vector<8x128xf32>
    %c1_27 = arith.constant 1 : index
    %c0_28 = arith.constant 0 : index
    %c0_29 = arith.constant 0 : index
    %c0_30 = arith.constant 0 : index
    %62 = vector.load %arg4[%c1_27, %c0_28, %c0_29, %c0_30] : memref<2x1x8x2xf32, #tpu.memory_space<vmem>>, vector<1x1x8x2xf32>
    %63 = vector.shape_cast %62 : vector<1x1x8x2xf32> to vector<8x2xf32>
    %cst_31 = arith.constant dense<0.000000e+00> : vector<32x128xf32>
    %64 = tpu.matmul %1, %61, %cst_31 {dimension_numbers = #tpu.dot_dimension_numbers<[1], [0], [0], [1], [0, 0, 1, 1], [], []>} : vector<32x8xf32>, vector<8x128xf32>, vector<32x128xf32> -> vector<32x128xf32>
    %65 = vector.broadcast %3 : vector<32x1xf32> to vector<32x128xf32>
    %66 = arith.addf %64, %65 : vector<32x128xf32>
    %cst_32 = arith.constant dense<0.000000e+00> : vector<32x2xf32>
    %67 = tpu.matmul %1, %63, %cst_32 {dimension_numbers = #tpu.dot_dimension_numbers<[1], [0], [0], [1], [0, 0, 1, 1], [], []>} : vector<32x8xf32>, vector<8x2xf32>, vector<32x2xf32> -> vector<32x2xf32>
    %68 = vector.broadcast %3 : vector<32x1xf32> to vector<32x2xf32>
    %69 = arith.addf %67, %68 : vector<32x2xf32>
    %cst_33 = arith.constant 0.000000e+00 : f32
    %70 = vector.broadcast %cst_33 : f32 to vector<32x128xf32>
    %71 = arith.cmpf ogt, %66, %70 : vector<32x128xf32>
    %72 = vector.broadcast %0 : f32 to vector<32x128xf32>
    %73 = arith.mulf %72, %66 : vector<32x128xf32>
    %74 = arith.select %71, %66, %73 : vector<32x128xi1>, vector<32x128xf32>
    %cst_34 = arith.constant 0.000000e+00 : f32
    %75 = vector.broadcast %cst_34 : f32 to vector<32x2xf32>
    %76 = arith.cmpf ogt, %69, %75 : vector<32x2xf32>
    %77 = vector.broadcast %0 : f32 to vector<32x2xf32>
    %78 = arith.mulf %77, %69 : vector<32x2xf32>
    %79 = arith.select %76, %69, %78 : vector<32x2xi1>, vector<32x2xf32>
    %cst_35 = arith.constant dense<0.000000e+00> : vector<24x128xf32>
    %80 = tpu.matmul %2, %74, %cst_35 {dimension_numbers = #tpu.dot_dimension_numbers<[1], [0], [0], [1], [0, 0, 1, 1], [], []>} : vector<24x32xf32>, vector<32x128xf32>, vector<24x128xf32> -> vector<24x128xf32>
    %81 = vector.extract_strided_slice %79 {offsets = [0, 0], sizes = [32, 1], strides = [1, 1]} : vector<32x2xf32> to vector<32x1xf32>
    %cst_36 = arith.constant dense<0.000000e+00> : vector<8x1xf32>
    %82 = tpu.matmul %5, %81, %cst_36 {dimension_numbers = #tpu.dot_dimension_numbers<[1], [0], [0], [1], [0, 0, 1, 1], [], []>} : vector<8x32xf32>, vector<32x1xf32>, vector<8x1xf32> -> vector<8x1xf32>
    %83 = vector.extract_strided_slice %79 {offsets = [0, 1], sizes = [32, 1], strides = [1, 1]} : vector<32x2xf32> to vector<32x1xf32>
    %cst_37 = arith.constant dense<0.000000e+00> : vector<8x1xf32>
    %84 = tpu.matmul %6, %83, %cst_37 {dimension_numbers = #tpu.dot_dimension_numbers<[1], [0], [0], [1], [0, 0, 1, 1], [], []>} : vector<8x32xf32>, vector<32x1xf32>, vector<8x1xf32> -> vector<8x1xf32>
    %85 = vector.extract_strided_slice %80 {offsets = [0, 0], sizes = [8, 128], strides = [1, 1]} : vector<24x128xf32> to vector<8x128xf32>
    %86 = vector.extract_strided_slice %80 {offsets = [8, 0], sizes = [8, 128], strides = [1, 1]} : vector<24x128xf32> to vector<8x128xf32>
    %87 = vector.extract_strided_slice %80 {offsets = [16, 0], sizes = [8, 128], strides = [1, 1]} : vector<24x128xf32> to vector<8x128xf32>
    %c1_i32_38 = arith.constant 1 : i32
    %88 = tpu.dynamic_rotate %85 by %c1_i32_38 dim 1 : vector<8x128xf32>, i32 -> vector<8x128xf32>
    %c0_i32_39 = arith.constant 0 : i32
    %89 = vector.broadcast %c0_i32_39 : i32 to vector<1x128xi32>
    %90 = arith.cmpi eq, %7, %89 : vector<1x128xi32>
    %91 = vector.shape_cast %90 : vector<1x128xi1> to vector<1x128xi1>
    %92 = vector.broadcast %91 : vector<1x128xi1> to vector<8x128xi1>
    %93 = vector.shape_cast %82 : vector<8x1xf32> to vector<8x1xf32>
    %94 = vector.broadcast %93 : vector<8x1xf32> to vector<8x128xf32>
    %95 = arith.select %92, %94, %88 : vector<8x128xi1>, vector<8x128xf32>
    %c127_i32_40 = arith.constant 127 : i32
    %96 = tpu.dynamic_rotate %87 by %c127_i32_40 dim 1 : vector<8x128xf32>, i32 -> vector<8x128xf32>
    %c127_i32_41 = arith.constant 127 : i32
    %97 = vector.broadcast %c127_i32_41 : i32 to vector<1x128xi32>
    %98 = arith.cmpi eq, %7, %97 : vector<1x128xi32>
    %99 = vector.shape_cast %98 : vector<1x128xi1> to vector<1x128xi1>
    %100 = vector.broadcast %99 : vector<1x128xi1> to vector<8x128xi1>
    %101 = vector.shape_cast %84 : vector<8x1xf32> to vector<8x1xf32>
    %102 = vector.broadcast %101 : vector<8x1xf32> to vector<8x128xf32>
    %103 = arith.select %100, %102, %96 : vector<8x128xi1>, vector<8x128xf32>
    %104 = arith.addf %95, %86 : vector<8x128xf32>
    %105 = arith.addf %104, %103 : vector<8x128xf32>
    %106 = vector.broadcast %4 : vector<8x1xf32> to vector<8x128xf32>
    %107 = arith.addf %105, %106 : vector<8x128xf32>
    %108 = arith.addf %107, %61 : vector<8x128xf32>
    %c1_42 = arith.constant 1 : index
    %c0_43 = arith.constant 0 : index
    %c0_44 = arith.constant 0 : index
    %109 = vector.load %arg9[%c1_42, %c0_43, %c0_44] : memref<2x8x128xf32, #tpu.memory_space<vmem>>, vector<1x8x128xf32>
    %110 = vector.shape_cast %109 : vector<1x8x128xf32> to vector<8x128xf32>
    %111 = vector.shape_cast %108 : vector<8x128xf32> to vector<1x8x128xf32>
    tpu.vector_store %arg9[%c1_42, %c0_43, %c0_44], %111 {strides = array<i32>} : memref<2x8x128xf32, #tpu.memory_space<vmem>>, vector<1x8x128xf32>,
    return
  }
  func.func @transform_0(%arg0: i32, %arg1: i32) -> i32 {
    %c0_i32 = arith.constant 0 : i32
    %c0_i32_0 = arith.constant 0 : i32
    return %c0_i32 : i32
  }
  func.func @transform_1(%arg0: i32, %arg1: i32) -> (i32, i32, i32) {
    %c0_i32 = arith.constant 0 : i32
    %c0_i32_0 = arith.constant 0 : i32
    return %arg0, %c0_i32, %arg1 : i32, i32, i32
  }
  func.func @transform_2(%arg0: i32, %arg1: i32) -> (i32, i32, i32, i32) {
    %c0_i32 = arith.constant 0 : i32
    %c0_i32_0 = arith.constant 0 : i32
    %c0_i32_1 = arith.constant 0 : i32
    return %arg0, %arg1, %c0_i32, %c0_i32_0 : i32, i32, i32, i32
  }
  func.func @transform_3(%arg0: i32, %arg1: i32) -> (i32, i32) {
    %c0_i32 = arith.constant 0 : i32
    %c0_i32_0 = arith.constant 0 : i32
    %c0_i32_1 = arith.constant 0 : i32
    return %c0_i32, %c0_i32_0 : i32, i32
  }
  func.func @transform_4(%arg0: i32, %arg1: i32) -> (i32, i32) {
    %c0_i32 = arith.constant 0 : i32
    %c0_i32_0 = arith.constant 0 : i32
    %c0_i32_1 = arith.constant 0 : i32
    return %c0_i32, %c0_i32_0 : i32, i32
  }
  func.func @transform_5(%arg0: i32, %arg1: i32) -> (i32, i32) {
    %c0_i32 = arith.constant 0 : i32
    %c0_i32_0 = arith.constant 0 : i32
    %c0_i32_1 = arith.constant 0 : i32
    return %c0_i32, %c0_i32_0 : i32, i32
  }
  func.func @transform_6(%arg0: i32, %arg1: i32) -> (i32, i32) {
    %c0_i32 = arith.constant 0 : i32
    %c0_i32_0 = arith.constant 0 : i32
    %c0_i32_1 = arith.constant 0 : i32
    return %c0_i32, %c0_i32_0 : i32, i32
  }
  func.func @transform_7(%arg0: i32, %arg1: i32) -> (i32, i32, i32) {
    %c0_i32 = arith.constant 0 : i32
    %c0_i32_0 = arith.constant 0 : i32
    return %arg0, %c0_i32, %arg1 : i32, i32, i32
  }
}

</mosaic_0001>

<llo_original>
// kernel: tpu_custom_call.1
$region0: #{tpu_custom_call.1}
  #allocation0 [shape = 'u32[]', space=smem, size = 0x4, offset = 0x4, fixed_abs, tag = 'smem constant byte address 0x4 - core index']
  #allocation1 [shape = 'u32[72,128]{1,0:T(1,128)}', space=vmem, size = 0x9000, scoped, tag = 'internal scratch']
  #allocation2 [shape = 'f32[1]{0:T(128)S(6)}', space=smem, size = 0x200, scoped, tag = 'scoped memory for tpu_custom_call.1']
  %s0 = inlined_call_operand.<no memory space> [shape: f32[1], index: 0, kind: input, shape index: {}]
  %s1 = inlined_call_operand.vmem [shape: f32[2,8,128], index: 1, kind: input, shape index: {}]
  %s2 = inlined_call_operand.vmem [shape: f32[2,1,8,2], index: 2, kind: input, shape index: {}]
  %s3 = inlined_call_operand.vmem [shape: f32[32,8], index: 3, kind: input, shape index: {}]
  %s4 = inlined_call_operand.vmem [shape: f32[32,1], index: 4, kind: input, shape index: {}]
  %s5 = inlined_call_operand.vmem [shape: f32[24,32], index: 5, kind: input, shape index: {}]
  %s6 = inlined_call_operand.vmem [shape: f32[8,1], index: 6, kind: input, shape index: {}]
  %s7 = inlined_call_operand.hbm [shape: f32[2,8,128], index: 7, kind: output, shape index: {}]
  %s8 = sld [smem:[#allocation0]]
  $region38: #{tpu_custom_call.1} parent=0
    _
  %s10 = ssub.s32 1, %s8
  %s11 = scalar_select 0, %s10, %s8
  %12 = sst [smem:[#allocation2]] %s0
  $region1: #{tpu_custom_call.1} parent=0
    #allocation3 [shape = 'u8[8192]{0}', space=vmem, size = 0x2000, scoped, tag = 'output window, operand 0, single buffered']
    #allocation4 [shape = 's32[1]{0}', space=sflag, size = 0x4, scoped, tag = 'scoped memory for tpu_custom_call.1']
    %13 = vsyncpa [#allocation4], 0
    // Predicated region
    $region2: #{tpu_custom_call.1} parent=1 // pred_check
      _
    $region3: #{tpu_custom_call.1} parent=1 // pred_check_branch
      %15 = sbr.rel (0) target = $region5
    $region4: #{tpu_custom_call.1} parent=1 // pred_region
      _
    $region5: #{tpu_custom_call.1} parent=1 // pred_fallthru
      _
    // Predicated region
    $region6: #{tpu_custom_call.1} parent=1 // pred_check
      _
    $region7: #{tpu_custom_call.1} parent=1 // pred_check_branch
      %17 = sbr.rel (0) target = $region9
    $region8: #{tpu_custom_call.1} parent=1 // pred_region
      _
    $region9: #{tpu_custom_call.1} parent=1 // pred_fallthru
      _
    // Predicated region
    $region10: #{tpu_custom_call.1} parent=1 // pred_check
      _
    $region11: #{tpu_custom_call.1} parent=1 // pred_check_branch
      %19 = sbr.rel (0) target = $region13
    $region12: #{tpu_custom_call.1} parent=1 // pred_region
      _
    $region13: #{tpu_custom_call.1} parent=1 // pred_fallthru
      _
    // Predicated region
    $region14: #{tpu_custom_call.1} parent=1 // pred_check
      _
    $region15: #{tpu_custom_call.1} parent=1 // pred_check_branch
      %21 = sbr.rel (0) target = $region17
    $region16: #{tpu_custom_call.1} parent=1 // pred_region
      _
    $region17: #{tpu_custom_call.1} parent=1 // pred_fallthru
      _
    // Predicated region
    $region18: #{tpu_custom_call.1} parent=1 // pred_check
      _
    $region19: #{tpu_custom_call.1} parent=1 // pred_check_branch
      %23 = sbr.rel (0) target = $region21
    $region20: #{tpu_custom_call.1} parent=1 // pred_region
      _
    $region21: #{tpu_custom_call.1} parent=1 // pred_fallthru
      _
    // Predicated region
    $region22: #{tpu_custom_call.1} parent=1 // pred_check
      _
    $region23: #{tpu_custom_call.1} parent=1 // pred_check_branch
      %25 = sbr.rel (0) target = $region25
    $region24: #{tpu_custom_call.1} parent=1 // pred_region
      _
    $region25: #{tpu_custom_call.1} parent=1 // pred_fallthru
      _
    // Predicated region
    $region26: #{tpu_custom_call.1} parent=1 // pred_check
      _
    $region27: #{tpu_custom_call.1} parent=1 // pred_check_branch
      %27 = sbr.rel (0) target = $region29
    $region28: #{tpu_custom_call.1} parent=1 // pred_region
      _
    $region29: #{tpu_custom_call.1} parent=1 // pred_fallthru
      _
    %s28 = sld [smem:[#allocation2]]
    %v29 = vld [vmem:[%s3] sm:$0xff]
    %v30 = vld [vmem:[%s3 + $0x8] sm:$0xff]
    %v31 = vld [vmem:[%s3 + $0x10] sm:$0xff]
    %v32 = vld [vmem:[%s3 + $0x18] sm:$0xff]
    %v33 = vld [vmem:[%s5] sm:$0xff]
    %v34 = vld [vmem:[%s5 + $0x8] sm:$0xff]
    %v35 = vld [vmem:[%s5 + $0x10] sm:$0xff]
    %v36 = vld [vmem:[%s4] sm:$0xff]
    %v37 = vld [vmem:[%s4 + $0x8] sm:$0xff]
    %v38 = vld [vmem:[%s4 + $0x10] sm:$0xff]
    %v39 = vld [vmem:[%s4 + $0x18] sm:$0xff]
    %v40 = vld [vmem:[%s6] sm:$0xff]
    %v41 = vlaneseq
    %v42 = vand.u32 %v41, 127
    %v43 = vld [vmem:[%s1] sm:$0xff]
    %v44 = vld [vmem:[%s2] sm:$0xff]
    %46 = vset.pattern.permute.xlu0 0
    %47 = vperm.xlu0 %46, %v36
    %v48 = vpop.permute.xlu0 %47
    %51 = vset.pattern.permute.xlu0 0
    %52 = vperm.xlu0 %51, %v37
    %v53 = vpop.permute.xlu0 %52
    %56 = vset.pattern.permute.xlu0 0
    %57 = vperm.xlu0 %56, %v38
    %v58 = vpop.permute.xlu0 %57
    %61 = vset.pattern.permute.xlu0 0
    %62 = vperm.xlu0 %61, %v39
    %v63 = vpop.permute.xlu0 %62
    %vm65 = vcmask 64512
    %v67 = vsel %vm65, %v29, 0
    %v70 = vsel %vm65, %v30, 0
    %v73 = vsel %vm65, %v31, 0
    %v76 = vsel %vm65, %v32, 0
    %78 = vmatpush.msra.mxu0 0.0
    %79 = vmatpush.msra.mxu0 0.0
    %80 = vmatpush.msra.mxu0 0.0
    %81 = vmatpush.msra.mxu0 0.0
    %82 = vmatpush.msra.mxu0 0.0
    %83 = vmatpush.msra.mxu0 0.0
    %84 = vmatpush.msra.mxu0 0.0
    %85 = vmatpush.msra.mxu0 0.0
    %86 = vmatpush.msra.mxu0 0.0
    %87 = vmatpush.msra.mxu0 0.0
    %88 = vmatpush.msra.mxu0 0.0
    %89 = vmatpush.msra.mxu0 0.0
    %90 = vmatpush.msra.mxu0 0.0
    %91 = vmatpush.msra.mxu0 0.0
    %92 = vmatpush.msra.mxu0 0.0
    %93 = vmatpush.msra.mxu0 %v43
    %94 = vmatmul.f32.gmra.mxu0 %v67
    %v95 = vpop.f32.mrf.mxu0
    %v96 = vadd.f32 %v48, %v95
    %97 = vmatmul.f32.gmra.mxu0 %v70
    %v98 = vpop.f32.mrf.mxu0
    %v99 = vadd.f32 %v53, %v98
    %100 = vmatmul.f32.gmra.mxu0 %v73
    %v101 = vpop.f32.mrf.mxu0
    %v102 = vadd.f32 %v58, %v101
    %103 = vmatmul.f32.gmra.mxu0 %v76
    %v104 = vpop.f32.mrf.mxu0
    %v105 = vadd.f32 %v63, %v104
    %106 = vdwg.mxu0
    %107 = vmatpush.msra.mxu0 0.0
    %108 = vmatpush.msra.mxu0 0.0
    %109 = vmatpush.msra.mxu0 0.0
    %110 = vmatpush.msra.mxu0 0.0
    %111 = vmatpush.msra.mxu0 0.0
    %112 = vmatpush.msra.mxu0 0.0
    %113 = vmatpush.msra.mxu0 0.0
    %114 = vmatpush.msra.mxu0 0.0
    %115 = vmatpush.msra.mxu0 0.0
    %116 = vmatpush.msra.mxu0 0.0
    %117 = vmatpush.msra.mxu0 0.0
    %118 = vmatpush.msra.mxu0 0.0
    %119 = vmatpush.msra.mxu0 0.0
    %120 = vmatpush.msra.mxu0 0.0
    %121 = vmatpush.msra.mxu0 0.0
    %122 = vmatpush.msra.mxu0 %v44
    %123 = vmatmul.f32.gmra.mxu0 %v67
    %v124 = vpop.f32.mrf.mxu0
    %v125 = vadd.f32 %v48, %v124
    %126 = vmatmul.f32.gmra.mxu0 %v70
    %v127 = vpop.f32.mrf.mxu0
    %v128 = vadd.f32 %v53, %v127
    %129 = vmatmul.f32.gmra.mxu0 %v73
    %v130 = vpop.f32.mrf.mxu0
    %v131 = vadd.f32 %v58, %v130
    %132 = vmatmul.f32.gmra.mxu0 %v76
    %v133 = vpop.f32.mrf.mxu0
    %v134 = vadd.f32 %v63, %v133
    %135 = vdwg.mxu0
    %vm136 = vcmp.gt.f32.partialorder %v96, 0.0
    %vm137 = vcmp.gt.f32.partialorder %v99, 0.0
    %vm138 = vcmp.gt.f32.partialorder %v102, 0.0
    %vm139 = vcmp.gt.f32.partialorder %v105, 0.0
    %v140 = vstv %s28
    %v141 = vmul.f32 %v140, %v96
    %v142 = vmul.f32 %v140, %v99
    %v143 = vmul.f32 %v140, %v102
    %v144 = vmul.f32 %v140, %v105
    %v145 = vsel %vm136, %v96, %v141
    %v146 = vsel %vm137, %v99, %v142
    %v147 = vsel %vm138, %v102, %v143
    %v148 = vsel %vm139, %v105, %v144
    %vm149 = vcmp.gt.f32.partialorder %v125, 0.0
    %vm150 = vcmp.gt.f32.partialorder %v128, 0.0
    %vm151 = vcmp.gt.f32.partialorder %v131, 0.0
    %vm152 = vcmp.gt.f32.partialorder %v134, 0.0
    %v153 = vmul.f32 %v140, %v125
    %v154 = vmul.f32 %v140, %v128
    %v155 = vmul.f32 %v140, %v131
    %v156 = vmul.f32 %v140, %v134
    %v157 = vsel %vm149, %v125, %v153
    %v158 = vsel %vm150, %v128, %v154
    %v159 = vsel %vm151, %v131, %v155
    %v160 = vsel %vm152, %v134, %v156
    %vm161 = vcmask 261120
    %v163 = vsel %vm161, %v33, 0
    %v166 = vsel %vm161, %v34, 0
    %v169 = vsel %vm161, %v35, 0
    %171 = vmatpush.msra.mxu0 0.0
    %172 = vmatpush.msra.mxu0 0.0
    %173 = vmatpush.msra.mxu0 0.0
    %174 = vmatpush.msra.mxu0 0.0
    %175 = vmatpush.msra.mxu0 0.0
    %176 = vmatpush.msra.mxu0 0.0
    %177 = vmatpush.msra.mxu0 0.0
    %178 = vmatpush.msra.mxu0 0.0
    %179 = vmatpush.msra.mxu0 0.0
    %180 = vmatpush.msra.mxu0 0.0
    %181 = vmatpush.msra.mxu0 0.0
    %182 = vmatpush.msra.mxu0 0.0
    %183 = vmatpush.msra.mxu0 %v148
    %184 = vmatpush.msra.mxu0 %v147
    %185 = vmatpush.msra.mxu0 %v146
    %186 = vmatpush.msra.mxu0 %v145
    %187 = vmatmul.f32.gmra.mxu0 %v163
    %v188 = vpop.f32.mrf.mxu0
    %v189 = vadd.f32 0.0, %v188
    %190 = vmatmul.f32.gmra.mxu0 %v166
    %v191 = vpop.f32.mrf.mxu0
    %v192 = vadd.f32 0.0, %v191
    %193 = vmatmul.f32.gmra.mxu0 %v169
    %v194 = vpop.f32.mrf.mxu0
    %v195 = vadd.f32 0.0, %v194
    %196 = vdwg.mxu0
    %197 = vmatpush.msra.mxu0 0.0
    %198 = vmatpush.msra.mxu0 0.0
    %199 = vmatpush.msra.mxu0 0.0
    %200 = vmatpush.msra.mxu0 0.0
    %201 = vmatpush.msra.mxu0 0.0
    %202 = vmatpush.msra.mxu0 0.0
    %203 = vmatpush.msra.mxu0 0.0
    %204 = vmatpush.msra.mxu0 0.0
    %205 = vmatpush.msra.mxu0 0.0
    %206 = vmatpush.msra.mxu0 0.0
    %207 = vmatpush.msra.mxu0 0.0
    %208 = vmatpush.msra.mxu0 0.0
    %209 = vmatpush.msra.mxu0 %v160
    %210 = vmatpush.msra.mxu0 %v159
    %211 = vmatpush.msra.mxu0 %v158
    %212 = vmatpush.msra.mxu0 %v157
    %213 = vmatmul.f32.gmra.mxu0 %v163
    %v214 = vpop.f32.mrf.mxu0
    %v215 = vadd.f32 0.0, %v214
    %216 = vdwg.mxu0
    %221 = vrot.lane.b32.xlu0 %v157, 127
    %v222 = vpop.permute.xlu0 %221
    %223 = vrot.lane.b32.xlu0 %v158, 127
    %v224 = vpop.permute.xlu0 %223
    %225 = vrot.lane.b32.xlu0 %v159, 127
    %v226 = vpop.permute.xlu0 %225
    %227 = vrot.lane.b32.xlu0 %v160, 127
    %v228 = vpop.permute.xlu0 %227
    %233 = vmatpush.msra.mxu0 0.0
    %234 = vmatpush.msra.mxu0 0.0
    %235 = vmatpush.msra.mxu0 0.0
    %236 = vmatpush.msra.mxu0 0.0
    %237 = vmatpush.msra.mxu0 0.0
    %238 = vmatpush.msra.mxu0 0.0
    %239 = vmatpush.msra.mxu0 0.0
    %240 = vmatpush.msra.mxu0 0.0
    %241 = vmatpush.msra.mxu0 0.0
    %242 = vmatpush.msra.mxu0 0.0
    %243 = vmatpush.msra.mxu0 0.0
    %244 = vmatpush.msra.mxu0 0.0
    %245 = vmatpush.msra.mxu0 %v228
    %246 = vmatpush.msra.mxu0 %v226
    %247 = vmatpush.msra.mxu0 %v224
    %248 = vmatpush.msra.mxu0 %v222
    %249 = vmatmul.f32.gmra.mxu0 %v169
    %v250 = vpop.f32.mrf.mxu0
    %v251 = vadd.f32 0.0, %v250
    %252 = vdwg.mxu0
    %253 = vrot.lane.b32.xlu0 %v189, 1
    %v254 = vpop.permute.xlu0 %253
    %vm255 = vcmp.eq.s32.totalorder %v42, 0
    %v256 = vsel %vm255, 1, 0
    %vm257 = vcmp.eq.s32.totalorder %v256, 1
    %259 = vset.pattern.permute.xlu0 0
    %260 = vperm.xlu0 %259, %v215
    %v261 = vpop.permute.xlu0 %260
    %v263 = vsel %vm257, %v261, %v254
    %264 = vrot.lane.b32.xlu0 %v195, 127
    %v265 = vpop.permute.xlu0 %264
    %vm266 = vcmp.eq.s32.totalorder %v42, 127
    %v267 = vsel %vm266, 1, 0
    %vm268 = vcmp.eq.s32.totalorder %v267, 1
    %270 = vset.pattern.permute.xlu0 0
    %271 = vperm.xlu0 %270, %v251
    %v272 = vpop.permute.xlu0 %271
    %v274 = vsel %vm268, %v272, %v265
    %v275 = vadd.f32 %v263, %v192
    %v276 = vadd.f32 %v275, %v274
    %278 = vset.pattern.permute.xlu0 0
    %279 = vperm.xlu0 %278, %v40
    %v280 = vpop.permute.xlu0 %279
    %v282 = vadd.f32 %v276, %v280
    %v283 = vadd.f32 %v282, %v43
    %284 = vst [vmem:[#allocation3] sm:$0xff] %v283
    %s285 = scalar_lea.vmem %s1, 8
    %v286 = vld [vmem:[%s285] sm:$0xff]
    %s287 = scalar_lea.vmem %s2, 8
    %v288 = vld [vmem:[%s287] sm:$0xff]
    %289 = vmatpush.msra.mxu0 0.0
    %290 = vmatpush.msra.mxu0 0.0
    %291 = vmatpush.msra.mxu0 0.0
    %292 = vmatpush.msra.mxu0 0.0
    %293 = vmatpush.msra.mxu0 0.0
    %294 = vmatpush.msra.mxu0 0.0
    %295 = vmatpush.msra.mxu0 0.0
    %296 = vmatpush.msra.mxu0 0.0
    %297 = vmatpush.msra.mxu0 0.0
    %298 = vmatpush.msra.mxu0 0.0
    %299 = vmatpush.msra.mxu0 0.0
    %300 = vmatpush.msra.mxu0 0.0
    %301 = vmatpush.msra.mxu0 0.0
    %302 = vmatpush.msra.mxu0 0.0
    %303 = vmatpush.msra.mxu0 0.0
    %304 = vmatpush.msra.mxu0 %v286
    %305 = vmatmul.f32.gmra.mxu0 %v67
    %v306 = vpop.f32.mrf.mxu0
    %v307 = vadd.f32 %v48, %v306
    %308 = vmatmul.f32.gmra.mxu0 %v70
    %v309 = vpop.f32.mrf.mxu0
    %v310 = vadd.f32 %v53, %v309
    %311 = vmatmul.f32.gmra.mxu0 %v73
    %v312 = vpop.f32.mrf.mxu0
    %v313 = vadd.f32 %v58, %v312
    %314 = vmatmul.f32.gmra.mxu0 %v76
    %v315 = vpop.f32.mrf.mxu0
    %v316 = vadd.f32 %v63, %v315
    %317 = vdwg.mxu0
    %318 = vmatpush.msra.mxu0 0.0
    %319 = vmatpush.msra.mxu0 0.0
    %320 = vmatpush.msra.mxu0 0.0
    %321 = vmatpush.msra.mxu0 0.0
    %322 = vmatpush.msra.mxu0 0.0
    %323 = vmatpush.msra.mxu0 0.0
    %324 = vmatpush.msra.mxu0 0.0
    %325 = vmatpush.msra.mxu0 0.0
    %326 = vmatpush.msra.mxu0 0.0
    %327 = vmatpush.msra.mxu0 0.0
    %328 = vmatpush.msra.mxu0 0.0
    %329 = vmatpush.msra.mxu0 0.0
    %330 = vmatpush.msra.mxu0 0.0
    %331 = vmatpush.msra.mxu0 0.0
    %332 = vmatpush.msra.mxu0 0.0
    %333 = vmatpush.msra.mxu0 %v288
    %334 = vmatmul.f32.gmra.mxu0 %v67
    %v335 = vpop.f32.mrf.mxu0
    %v336 = vadd.f32 %v48, %v335
    %337 = vmatmul.f32.gmra.mxu0 %v70
    %v338 = vpop.f32.mrf.mxu0
    %v339 = vadd.f32 %v53, %v338
    %340 = vmatmul.f32.gmra.mxu0 %v73
    %v341 = vpop.f32.mrf.mxu0
    %v342 = vadd.f32 %v58, %v341
    %343 = vmatmul.f32.gmra.mxu0 %v76
    %v344 = vpop.f32.mrf.mxu0
    %v345 = vadd.f32 %v63, %v344
    %346 = vdwg.mxu0
    %vm347 = vcmp.gt.f32.partialorder %v307, 0.0
    %vm348 = vcmp.gt.f32.partialorder %v310, 0.0
    %vm349 = vcmp.gt.f32.partialorder %v313, 0.0
    %vm350 = vcmp.gt.f32.partialorder %v316, 0.0
    %v351 = vmul.f32 %v140, %v307
    %v352 = vmul.f32 %v140, %v310
    %v353 = vmul.f32 %v140, %v313
    %v354 = vmul.f32 %v140, %v316
    %v355 = vsel %vm347, %v307, %v351
    %v356 = vsel %vm348, %v310, %v352
    %v357 = vsel %vm349, %v313, %v353
    %v358 = vsel %vm350, %v316, %v354
    %vm359 = vcmp.gt.f32.partialorder %v336, 0.0
    %vm360 = vcmp.gt.f32.partialorder %v339, 0.0
    %vm361 = vcmp.gt.f32.partialorder %v342, 0.0
    %vm362 = vcmp.gt.f32.partialorder %v345, 0.0
    %v363 = vmul.f32 %v140, %v336
    %v364 = vmul.f32 %v140, %v339
    %v365 = vmul.f32 %v140, %v342
    %v366 = vmul.f32 %v140, %v345
    %v367 = vsel %vm359, %v336, %v363
    %v368 = vsel %vm360, %v339, %v364
    %v369 = vsel %vm361, %v342, %v365
    %v370 = vsel %vm362, %v345, %v366
    %371 = vmatpush.msra.mxu0 0.0
    %372 = vmatpush.msra.mxu0 0.0
    %373 = vmatpush.msra.mxu0 0.0
    %374 = vmatpush.msra.mxu0 0.0
    %375 = vmatpush.msra.mxu0 0.0
    %376 = vmatpush.msra.mxu0 0.0
    %377 = vmatpush.msra.mxu0 0.0
    %378 = vmatpush.msra.mxu0 0.0
    %379 = vmatpush.msra.mxu0 0.0
    %380 = vmatpush.msra.mxu0 0.0
    %381 = vmatpush.msra.mxu0 0.0
    %382 = vmatpush.msra.mxu0 0.0
    %383 = vmatpush.msra.mxu0 %v358
    %384 = vmatpush.msra.mxu0 %v357
    %385 = vmatpush.msra.mxu0 %v356
    %386 = vmatpush.msra.mxu0 %v355
    %387 = vmatmul.f32.gmra.mxu0 %v163
    %v388 = vpop.f32.mrf.mxu0
    %v389 = vadd.f32 0.0, %v388
    %390 = vmatmul.f32.gmra.mxu0 %v166
    %v391 = vpop.f32.mrf.mxu0
    %v392 = vadd.f32 0.0, %v391
    %393 = vmatmul.f32.gmra.mxu0 %v169
    %v394 = vpop.f32.mrf.mxu0
    %v395 = vadd.f32 0.0, %v394
    %396 = vdwg.mxu0
    %397 = vmatpush.msra.mxu0 0.0
    %398 = vmatpush.msra.mxu0 0.0
    %399 = vmatpush.msra.mxu0 0.0
    %400 = vmatpush.msra.mxu0 0.0
    %401 = vmatpush.msra.mxu0 0.0
    %402 = vmatpush.msra.mxu0 0.0
    %403 = vmatpush.msra.mxu0 0.0
    %404 = vmatpush.msra.mxu0 0.0
    %405 = vmatpush.msra.mxu0 0.0
    %406 = vmatpush.msra.mxu0 0.0
    %407 = vmatpush.msra.mxu0 0.0
    %408 = vmatpush.msra.mxu0 0.0
    %409 = vmatpush.msra.mxu0 %v370
    %410 = vmatpush.msra.mxu0 %v369
    %411 = vmatpush.msra.mxu0 %v368
    %412 = vmatpush.msra.mxu0 %v367
    %413 = vmatmul.f32.gmra.mxu0 %v163
    %v414 = vpop.f32.mrf.mxu0
    %v415 = vadd.f32 0.0, %v414
    %416 = vdwg.mxu0
    %421 = vrot.lane.b32.xlu0 %v367, 127
    %v422 = vpop.permute.xlu0 %421
    %423 = vrot.lane.b32.xlu0 %v368, 127
    %v424 = vpop.permute.xlu0 %423
    %425 = vrot.lane.b32.xlu0 %v369, 127
    %v426 = vpop.permute.xlu0 %425
    %427 = vrot.lane.b32.xlu0 %v370, 127
    %v428 = vpop.permute.xlu0 %427
    %433 = vmatpush.msra.mxu0 0.0
    %434 = vmatpush.msra.mxu0 0.0
    %435 = vmatpush.msra.mxu0 0.0
    %436 = vmatpush.msra.mxu0 0.0
    %437 = vmatpush.msra.mxu0 0.0
    %438 = vmatpush.msra.mxu0 0.0
    %439 = vmatpush.msra.mxu0 0.0
    %440 = vmatpush.msra.mxu0 0.0
    %441 = vmatpush.msra.mxu0 0.0
    %442 = vmatpush.msra.mxu0 0.0
    %443 = vmatpush.msra.mxu0 0.0
    %444 = vmatpush.msra.mxu0 0.0
    %445 = vmatpush.msra.mxu0 %v428
    %446 = vmatpush.msra.mxu0 %v426
    %447 = vmatpush.msra.mxu0 %v424
    %448 = vmatpush.msra.mxu0 %v422
    %449 = vmatmul.f32.gmra.mxu0 %v169
    %v450 = vpop.f32.mrf.mxu0
    %v451 = vadd.f32 0.0, %v450
    %452 = vdwg.mxu0
    %453 = vrot.lane.b32.xlu0 %v389, 1
    %v454 = vpop.permute.xlu0 %453
    %456 = vset.pattern.permute.xlu0 0
    %457 = vperm.xlu0 %456, %v415
    %v458 = vpop.permute.xlu0 %457
    %v460 = vsel %vm257, %v458, %v454
    %461 = vrot.lane.b32.xlu0 %v395, 127
    %v462 = vpop.permute.xlu0 %461
    %464 = vset.pattern.permute.xlu0 0
    %465 = vperm.xlu0 %464, %v451
    %v466 = vpop.permute.xlu0 %465
    %v468 = vsel %vm268, %v466, %v462
    %v469 = vadd.f32 %v460, %v392
    %v470 = vadd.f32 %v469, %v468
    %v471 = vadd.f32 %v470, %v280
    %v472 = vadd.f32 %v471, %v286
    %s473 = scalar_lea.vmem [#allocation3], 8
    %474 = vst [vmem:[%s473] sm:$0xff] %v472
    // Predicated region
    $region30: #{tpu_custom_call.1} parent=1 // pred_check
      _
    $region31: #{tpu_custom_call.1} parent=1 // pred_check_branch
      %476 = sbr.rel (0) target = $region33
    $region32: #{tpu_custom_call.1} parent=1 // pred_region
      %478 = vsyncadd [#allocation4], 0
      %s479 = sshll.u32 [#allocation3], 4
      %s480 = int_to_ptr.vmem [resolvable:$true] %s479
      %s481 = sshll.u32 %s7, 4
      %s482 = int_to_ptr.hbm [resolvable:$true] %s481
      %487 = dma.vmem_to_hbm [thread:$0]  %s480, 256, %s482, [#allocation4], 128, 128, 8
    $region33: #{tpu_custom_call.1} parent=1 // pred_fallthru
      _
    // Predicated region
    $region34: #{tpu_custom_call.1} parent=1 // pred_check
      _
    $region35: #{tpu_custom_call.1} parent=1 // pred_check_branch
      %489 = sbr.rel (0) target = $region37
    $region36: #{tpu_custom_call.1} parent=1 // pred_region
      %491 = dma.done [#allocation4], 256
    $region37: #{tpu_custom_call.1} parent=1 // pred_fallthru
      _
    %492 = vsyncpa [#allocation4], 1

</llo_original>
